<compile_context>
chip_gen: v5e
topology: v5e:2x2
jax: 0.10.0
libtpu: 0.0.40
codegen_flags: <defaults>
</compile_context>

<pallas_src>
import jax
import jax.numpy as jnp
from jax.experimental import pallas as pl
from jax.experimental.pallas import tpu as pltpu

# --- small, module-consistent sizes -----------------------------------------
LAGGING_SIZE = 4
LATENT_SIZE = 8
ACTION_SIZE = 2
NUM_SAMPLE_TRAJ = 8
HIDDEN_SIZE = 32
EMB_SIZE = LATENT_SIZE + NUM_SAMPLE_TRAJ            # latent + num_sample_trajectories
ROLL_K = LAGGING_SIZE * (LATENT_SIZE + ACTION_SIZE)  # 40: [states_flat | actions_flat]

# --- packed parameter slab layout (PARAM_ROWS x 128, f32) --------------------
R_WROLL = 0            # rows 0:40,  cols 0:8   surrogate rollout weight (K=40, N=8)
R_WHID = R_WROLL + ROLL_K   # rows 40:56, cols 0:64  [W_pol | W_c1] (K=16, N=64)
R_BROLL = R_WHID + EMB_SIZE  # row 56, cols 0:8
R_BHID = R_BROLL + 1         # row 57, cols 0:64   [b_pol | b_c1]
R_WC2 = R_BHID + 1           # row 58, cols 0:32   critic fc2 weight, stored as a row
R_MISC = R_WC2 + 1           # row 59: cols 0:2 const_mean, 2:4 raw_noise, 4 b_c2
PARAM_ROWS = 64              # pad 60 -> 64 (multiple of 8 sublanes)
PARAM_LANES = 128

# --- packed output row lane layout (1 x 128, f32) -----------------------------
O_EMB = 0                      # 16 lanes
O_PHID = O_EMB + EMB_SIZE      # 32 lanes
O_PMEAN = O_PHID + HIDDEN_SIZE  # 2 lanes
O_PSTD = O_PMEAN + ACTION_SIZE  # 2 lanes
O_VALUE = O_PSTD + ACTION_SIZE  # 1 lane
OUT_LANES = 128


def _stable_softplus(x):
    # GaussianLikelihood noise constraint; avoids exp overflow for large x.
    return jnp.where(x > 20.0, x, jnp.log1p(jnp.exp(jnp.minimum(x, 20.0))))


def _planner_kernel(x_ref, p_ref, out_ref):
    # x_ref: (1, 128) = [states_flat(32) | actions_flat(8) | zero pad]
    # p_ref: (64, 128) packed parameter slab (see layout above)
    # out_ref: (1, 128) = [emb(16) | phid(32) | pmean(2) | pstd(2) | value(1) | pad]

    roll_in = x_ref[:, 0:ROLL_K]                                   # (1, 40)
    cs = x_ref[:, (LAGGING_SIZE - 1) * LATENT_SIZE:
               LAGGING_SIZE * LATENT_SIZE]                         # (1, 8) current state

    # --- imaginary rollout (linear surrogate for external recurrent_gp) ---
    reward = (jnp.dot(roll_in,
                      p_ref[R_WROLL:R_WROLL + ROLL_K, 0:NUM_SAMPLE_TRAJ],
                      preferred_element_type=jnp.float32)
              + p_ref[R_BROLL:R_BROLL + 1, 0:NUM_SAMPLE_TRAJ])     # (1, 8)

    # --- embedding: stage into the output row, read back as the fused operand ---
    out_ref[...] = jnp.zeros((1, OUT_LANES), jnp.float32)
    out_ref[:, O_EMB:O_EMB + LATENT_SIZE] = cs
    out_ref[:, O_EMB + LATENT_SIZE:O_EMB + EMB_SIZE] = reward
    emb = out_ref[:, O_EMB:O_EMB + EMB_SIZE]                       # (1, 16)

    # --- fused actor LinearMean + critic fc1: one (1,16)@(16,64) MXU dot ---
    hid = (jnp.dot(emb,
                   p_ref[R_WHID:R_WHID + EMB_SIZE, 0:2 * HIDDEN_SIZE],
                   preferred_element_type=jnp.float32)
           + p_ref[R_BHID:R_BHID + 1, 0:2 * HIDDEN_SIZE])          # (1, 64)
    phid = hid[:, 0:HIDDEN_SIZE]                                   # actor first-layer mean
    h_crit = jnp.maximum(hid[:, HIDDEN_SIZE:2 * HIDDEN_SIZE], 0.0)  # critic relu(fc1)

    # --- critic fc2 (32 -> 1) as lane multiply + reduce (no extra MXU push) ---
    value = (jnp.sum(h_crit * p_ref[R_WC2:R_WC2 + 1, 0:HIDDEN_SIZE],
                     axis=-1, keepdims=True)
             + p_ref[R_MISC:R_MISC + 1, 2 * ACTION_SIZE:2 * ACTION_SIZE + 1])  # (1, 1)

    # --- actor SecondPolicyLayer ConstantMean + GaussianLikelihood noise ---
    const_mean = p_ref[R_MISC:R_MISC + 1, 0:ACTION_SIZE]           # (1, 2)
    raw_noise = p_ref[R_MISC:R_MISC + 1, ACTION_SIZE:2 * ACTION_SIZE]
    pstd = jnp.sqrt(_stable_softplus(raw_noise))                   # (1, 2)

    out_ref[:, O_PHID:O_PHID + HIDDEN_SIZE] = phid
    out_ref[:, O_PMEAN:O_PMEAN + ACTION_SIZE] = const_mean
    out_ref[:, O_PSTD:O_PSTD + ACTION_SIZE] = pstd
    out_ref[:, O_VALUE:O_VALUE + 1] = value


def init_params(key):
    keys = jax.random.split(key, 9)

    def w(k, shape, scale=0.1):
        return (scale * jax.random.normal(k, shape)).astype(jnp.float32)

    return dict(
        # surrogate recurrent_gp rollout: [states_flat | actions_flat] -> rewards
        w_roll=w(keys[0], (ROLL_K, NUM_SAMPLE_TRAJ)),
        b_roll=w(keys[1], (1, NUM_SAMPLE_TRAJ)),
        # actor FirstPolicyLayer LinearMean over the embedding
        w_pol=w(keys[2], (EMB_SIZE, HIDDEN_SIZE)),
        b_pol=w(keys[3], (1, HIDDEN_SIZE)),
        # actor SecondPolicyLayer ConstantMean + likelihood raw noise
        const_mean=w(keys[4], (1, ACTION_SIZE)),
        raw_noise=w(keys[5], (1, ACTION_SIZE)),
        # critic ValueNetwork
        w_c1=w(keys[6], (EMB_SIZE, HIDDEN_SIZE)),
        b_c1=w(keys[7], (1, HIDDEN_SIZE)),
        w_c2=w(keys[8], (HIDDEN_SIZE, 1)),
        b_c2=jnp.zeros((1, 1), jnp.float32),
    )


def pack_params(params):
    """Pack all weights/biases into one (64, 128) f32 slab (done once, host-side)."""
    slab = jnp.zeros((PARAM_ROWS, PARAM_LANES), jnp.float32)
    slab = slab.at[R_WROLL:R_WROLL + ROLL_K, 0:NUM_SAMPLE_TRAJ].set(params["w_roll"])
    slab = slab.at[R_WHID:R_WHID + EMB_SIZE, 0:2 * HIDDEN_SIZE].set(
        jnp.concatenate([params["w_pol"], params["w_c1"]], axis=1))
    slab = slab.at[R_BROLL, 0:NUM_SAMPLE_TRAJ].set(params["b_roll"][0])
    slab = slab.at[R_BHID, 0:2 * HIDDEN_SIZE].set(
        jnp.concatenate([params["b_pol"], params["b_c1"]], axis=1)[0])
    slab = slab.at[R_WC2, 0:HIDDEN_SIZE].set(params["w_c2"][:, 0])
    slab = slab.at[R_MISC, 0:ACTION_SIZE].set(params["const_mean"][0])
    slab = slab.at[R_MISC, ACTION_SIZE:2 * ACTION_SIZE].set(params["raw_noise"][0])
    slab = slab.at[R_MISC, 2 * ACTION_SIZE].set(params["b_c2"][0, 0])
    return slab


@jax.jit
def actor_critic_planner_forward(lagging_states, lagging_actions, param_slab):
    """Returns ((policy_mean, policy_std), value, embedding, policy_hidden_mean)."""
    sf = lagging_states.reshape(1, LAGGING_SIZE * LATENT_SIZE)
    af = lagging_actions.reshape(1, LAGGING_SIZE * ACTION_SIZE)
    x = jnp.zeros((1, OUT_LANES), jnp.float32)
    x = x.at[:, 0:LAGGING_SIZE * LATENT_SIZE].set(sf)
    x = x.at[:, LAGGING_SIZE * LATENT_SIZE:ROLL_K].set(af)

    out = pl.pallas_call(
        _planner_kernel,
        out_shape=jax.ShapeDtypeStruct((1, OUT_LANES), jnp.float32),
    )(x, param_slab)

    emb = out[:, O_EMB:O_EMB + EMB_SIZE]
    phid = out[:, O_PHID:O_PHID + HIDDEN_SIZE]
    pmean = out[:, O_PMEAN:O_PMEAN + ACTION_SIZE]
    pstd = out[:, O_PSTD:O_PSTD + ACTION_SIZE]
    value = out[:, O_VALUE:O_VALUE + 1]
    return (pmean, pstd), value, emb, phid


def _reference_forward(lagging_states, lagging_actions, params):
    """Pure-JAX reference with identical semantics (for correctness check)."""
    cs = lagging_states[-1].reshape(1, LATENT_SIZE)
    sf = lagging_states.reshape(1, -1)
    af = lagging_actions.reshape(1, -1)
    reward = jnp.concatenate([sf, af], axis=-1) @ params["w_roll"] + params["b_roll"]
    emb = jnp.concatenate([cs, reward], axis=-1)
    phid = emb @ params["w_pol"] + params["b_pol"]
    pmean = params["const_mean"]
    pstd = jnp.sqrt(_stable_softplus(params["raw_noise"]))
    h = jnp.maximum(emb @ params["w_c1"] + params["b_c1"], 0.0)
    value = h @ params["w_c2"] + params["b_c2"]
    return (pmean, pstd), value, emb, phid


if __name__ == "__main__":
    key = jax.random.PRNGKey(0)
    k_params, k_states, k_actions = jax.random.split(key, 3)

    params = init_params(k_params)
    param_slab = pack_params(params)
    lagging_states = jax.random.normal(
        k_states, (LAGGING_SIZE, LATENT_SIZE), dtype=jnp.float32)
    lagging_actions = jax.random.normal(
        k_actions, (LAGGING_SIZE, ACTION_SIZE), dtype=jnp.float32)

    (pmean, pstd), value, emb, phid = actor_critic_planner_forward(
        lagging_states, lagging_actions, param_slab)
    jax.block_until_ready((pmean, pstd, value, emb, phid))

    assert pmean.shape == (1, ACTION_SIZE)
    assert pstd.shape == (1, ACTION_SIZE)
    assert value.shape == (1, 1)
    assert emb.shape == (1, EMB_SIZE)
    assert phid.shape == (1, HIDDEN_SIZE)

    (rm, rs), rv, re, rp = _reference_forward(lagging_states, lagging_actions, params)
    for got, want in ((pmean, rm), (pstd, rs), (value, rv), (emb, re), (phid, rp)):
        assert bool(jnp.all(jnp.isfinite(got)))
        assert bool(jnp.allclose(got, want, rtol=2e-2, atol=2e-2))

    print("KERNEL_OK")
</pallas_src>

<mosaic_0001>
module attributes {stable_mosaic.version = 11 : i64} {
  func.func @_planner_kernel(%arg0: memref<1x128xf32, #tpu.memory_space<vmem>>, %arg1: memref<64x128xf32, #tpu.memory_space<vmem>>, %arg2: memref<1x128xf32, #tpu.memory_space<vmem>>) attributes {dimension_semantics = [], scalar_prefetch = 0 : i64, scratch_operands = 0 : i64, tpu.core_type = #tpu.core_type<tc>} {
    %c0 = arith.constant 0 : index
    %c0_0 = arith.constant 0 : index
    %0 = vector.load %arg0[%c0, %c0_0] : memref<1x128xf32, #tpu.memory_space<vmem>>, vector<1x40xf32>
    %c0_1 = arith.constant 0 : index
    %c24 = arith.constant 24 : index
    %1 = vector.load %arg0[%c0_1, %c24] : memref<1x128xf32, #tpu.memory_space<vmem>>, vector<1x8xf32>
    %c0_2 = arith.constant 0 : index
    %c0_3 = arith.constant 0 : index
    %2 = vector.load %arg1[%c0_2, %c0_3] : memref<64x128xf32, #tpu.memory_space<vmem>>, vector<40x8xf32>
    %cst = arith.constant dense<0.000000e+00> : vector<1x8xf32>
    %3 = tpu.matmul %0, %2, %cst {dimension_numbers = #tpu.dot_dimension_numbers<[1], [0], [0], [1], [0, 0, 1, 1], [], []>} : vector<1x40xf32>, vector<40x8xf32>, vector<1x8xf32> -> vector<1x8xf32>
    %c56 = arith.constant 56 : index
    %c0_4 = arith.constant 0 : index
    %4 = vector.load %arg1[%c56, %c0_4] : memref<64x128xf32, #tpu.memory_space<vmem>>, vector<1x8xf32>
    %5 = arith.addf %3, %4 : vector<1x8xf32>
    %cst_5 = arith.constant 0.000000e+00 : f32
    %6 = vector.broadcast %cst_5 : f32 to vector<1x128xf32>
    %c0_6 = arith.constant 0 : index
    %c0_7 = arith.constant 0 : index
    %7 = vector.load %arg2[%c0_6, %c0_7] : memref<1x128xf32, #tpu.memory_space<vmem>>, vector<1x128xf32>
    tpu.vector_store %arg2[%c0_6, %c0_7], %6 {strides = array<i32>} : memref<1x128xf32, #tpu.memory_space<vmem>>, vector<1x128xf32>,
    %c0_8 = arith.constant 0 : index
    %c0_9 = arith.constant 0 : index
    %8 = vector.load %arg2[%c0_8, %c0_9] : memref<1x128xf32, #tpu.memory_space<vmem>>, vector<1x8xf32>
    tpu.vector_store %arg2[%c0_8, %c0_9], %1 {strides = array<i32>} : memref<1x128xf32, #tpu.memory_space<vmem>>, vector<1x8xf32>,
    %c0_10 = arith.constant 0 : index
    %c8 = arith.constant 8 : index
    %9 = vector.load %arg2[%c0_10, %c8] : memref<1x128xf32, #tpu.memory_space<vmem>>, vector<1x8xf32>
    tpu.vector_store %arg2[%c0_10, %c8], %5 {strides = array<i32>} : memref<1x128xf32, #tpu.memory_space<vmem>>, vector<1x8xf32>,
    %c0_11 = arith.constant 0 : index
    %c0_12 = arith.constant 0 : index
    %10 = vector.load %arg2[%c0_11, %c0_12] : memref<1x128xf32, #tpu.memory_space<vmem>>, vector<1x16xf32>
    %c40 = arith.constant 40 : index
    %c0_13 = arith.constant 0 : index
    %11 = vector.load %arg1[%c40, %c0_13] : memref<64x128xf32, #tpu.memory_space<vmem>>, vector<16x64xf32>
    %cst_14 = arith.constant dense<0.000000e+00> : vector<1x64xf32>
    %12 = tpu.matmul %10, %11, %cst_14 {dimension_numbers = #tpu.dot_dimension_numbers<[1], [0], [0], [1], [0, 0, 1, 1], [], []>} : vector<1x16xf32>, vector<16x64xf32>, vector<1x64xf32> -> vector<1x64xf32>
    %c57 = arith.constant 57 : index
    %c0_15 = arith.constant 0 : index
    %13 = vector.load %arg1[%c57, %c0_15] : memref<64x128xf32, #tpu.memory_space<vmem>>, vector<1x64xf32>
    %14 = arith.addf %12, %13 : vector<1x64xf32>
    %15 = vector.extract_strided_slice %14 {offsets = [0, 0], sizes = [1, 32], strides = [1, 1]} : vector<1x64xf32> to vector<1x32xf32>
    %16 = vector.extract_strided_slice %14 {offsets = [0, 32], sizes = [1, 32], strides = [1, 1]} : vector<1x64xf32> to vector<1x32xf32>
    %cst_16 = arith.constant 0.000000e+00 : f32
    %17 = vector.broadcast %cst_16 : f32 to vector<1x32xf32>
    %18 = arith.maximumf %16, %17 : vector<1x32xf32>
    %c58 = arith.constant 58 : index
    %c0_17 = arith.constant 0 : index
    %19 = vector.load %arg1[%c58, %c0_17] : memref<64x128xf32, #tpu.memory_space<vmem>>, vector<1x32xf32>
    %20 = arith.mulf %18, %19 : vector<1x32xf32>
    %cst_18 = arith.constant dense<0.000000e+00> : vector<1xf32>
    %21 = vector.multi_reduction <add>, %20, %cst_18 [1] : vector<1x32xf32> to vector<1xf32>
    %22 = vector.shape_cast %21 : vector<1xf32> to vector<1x1xf32>
    %c59 = arith.constant 59 : index
    %c4 = arith.constant 4 : index
    %23 = vector.load %arg1[%c59, %c4] : memref<64x128xf32, #tpu.memory_space<vmem>>, vector<1x1xf32>
    %24 = arith.addf %22, %23 : vector<1x1xf32>
    %c59_19 = arith.constant 59 : index
    %c0_20 = arith.constant 0 : index
    %25 = vector.load %arg1[%c59_19, %c0_20] : memref<64x128xf32, #tpu.memory_space<vmem>>, vector<1x2xf32>
    %c59_21 = arith.constant 59 : index
    %c2 = arith.constant 2 : index
    %26 = vector.load %arg1[%c59_21, %c2] : memref<64x128xf32, #tpu.memory_space<vmem>>, vector<1x2xf32>
    %cst_22 = arith.constant 2.000000e+01 : f32
    %27 = vector.broadcast %cst_22 : f32 to vector<1x2xf32>
    %28 = arith.cmpf ogt, %26, %27 : vector<1x2xf32>
    %cst_23 = arith.constant 2.000000e+01 : f32
    %29 = vector.broadcast %cst_23 : f32 to vector<1x2xf32>
    %30 = arith.minimumf %26, %29 : vector<1x2xf32>
    %31 = math.exp %30 : vector<1x2xf32>
    %32 = math.log1p %31 : vector<1x2xf32>
    %33 = arith.select %28, %26, %32 : vector<1x2xi1>, vector<1x2xf32>
    %34 = math.sqrt %33 : vector<1x2xf32>
    %c0_24 = arith.constant 0 : index
    %c16 = arith.constant 16 : index
    %35 = vector.load %arg2[%c0_24, %c16] : memref<1x128xf32, #tpu.memory_space<vmem>>, vector<1x32xf32>
    tpu.vector_store %arg2[%c0_24, %c16], %15 {strides = array<i32>} : memref<1x128xf32, #tpu.memory_space<vmem>>, vector<1x32xf32>,
    %c0_25 = arith.constant 0 : index
    %c48 = arith.constant 48 : index
    %36 = vector.load %arg2[%c0_25, %c48] : memref<1x128xf32, #tpu.memory_space<vmem>>, vector<1x2xf32>
    tpu.vector_store %arg2[%c0_25, %c48], %25 {strides = array<i32>} : memref<1x128xf32, #tpu.memory_space<vmem>>, vector<1x2xf32>,
    %c0_26 = arith.constant 0 : index
    %c50 = arith.constant 50 : index
    %37 = vector.load %arg2[%c0_26, %c50] : memref<1x128xf32, #tpu.memory_space<vmem>>, vector<1x2xf32>
    tpu.vector_store %arg2[%c0_26, %c50], %34 {strides = array<i32>} : memref<1x128xf32, #tpu.memory_space<vmem>>, vector<1x2xf32>,
    %c0_27 = arith.constant 0 : index
    %c52 = arith.constant 52 : index
    %38 = vector.load %arg2[%c0_27, %c52] : memref<1x128xf32, #tpu.memory_space<vmem>>, vector<1x1xf32>
    tpu.vector_store %arg2[%c0_27, %c52], %24 {strides = array<i32>} : memref<1x128xf32, #tpu.memory_space<vmem>>, vector<1x1xf32>,
    return
  }
}

</mosaic_0001>

<llo_original>
// kernel: actor_critic_planner_forward.1
$region0: #{actor_critic_planner_forward.1}
  #allocation0 [shape = 'u32[]', space=smem, size = 0x4, offset = 0x4, fixed_abs, tag = 'smem constant byte address 0x4 - core index']
  #allocation1 [shape = 'u32[72,128]{1,0:T(1,128)}', space=vmem, size = 0x9000, scoped, tag = 'internal scratch']
  %s0 = inlined_call_operand.vmem [shape: f32[1,128], index: 0, kind: input, shape index: {}]
  %s1 = inlined_call_operand.hbm [shape: f32[64,128], index: 1, kind: input, shape index: {}]
  %s2 = inlined_call_operand.vmem [shape: f32[1,128], index: 2, kind: output, shape index: {}]
  %s3 = sld [smem:[#allocation0]]
  $region22: #{actor_critic_planner_forward.1} parent=0
    _
  %s5 = ssub.s32 1, %s3
  %s6 = scalar_select 0, %s5, %s3
  $region1: #{actor_critic_planner_forward.1} parent=0
    #allocation2 [shape = 'u8[32768]{0}', space=vmem, size = 0x8000, scoped, tag = 'input window, operand 1, single buffered']
    #allocation3 [shape = 's32[1]{0}', space=sflag, size = 0x4, scoped, tag = 'scoped memory for actor_critic_planner_forward.1']
    %7 = vsyncpa [#allocation3], 0
    // Predicated region
    $region2: #{actor_critic_planner_forward.1} parent=1 // pred_check
      _
    $region3: #{actor_critic_planner_forward.1} parent=1 // pred_check_branch
      %9 = sbr.rel (0) target = $region5
    $region4: #{actor_critic_planner_forward.1} parent=1 // pred_region
      _
    $region5: #{actor_critic_planner_forward.1} parent=1 // pred_fallthru
      _
    // Predicated region
    $region6: #{actor_critic_planner_forward.1} parent=1 // pred_check
      _
    $region7: #{actor_critic_planner_forward.1} parent=1 // pred_check_branch
      %11 = sbr.rel (0) target = $region9
    $region8: #{actor_critic_planner_forward.1} parent=1 // pred_region
      %13 = vsyncadd [#allocation3], 0
      %s14 = sshll.u32 %s1, 4
      %s15 = int_to_ptr.hbm [resolvable:$true] %s14
      %s16 = sshll.u32 [#allocation2], 4
      %s17 = int_to_ptr.vmem [resolvable:$true] %s16
      %22 = dma.hbm_to_vmem [thread:$0]  %s15, 1024, %s17, [#allocation3], 128, 128, 8
    $region9: #{actor_critic_planner_forward.1} parent=1 // pred_fallthru
      _
    // Predicated region
    $region10: #{actor_critic_planner_forward.1} parent=1 // pred_check
      _
    $region11: #{actor_critic_planner_forward.1} parent=1 // pred_check_branch
      %24 = sbr.rel (0) target = $region13
    $region12: #{actor_critic_planner_forward.1} parent=1 // pred_region
      %26 = dma.done [#allocation3], 1024
    $region13: #{actor_critic_planner_forward.1} parent=1 // pred_fallthru
      _
    %v27 = vld [vmem:[%s0] sm:$0x1]
    %v28 = vld [vmem:[#allocation2] sm:$0xff]
    %v29 = vld [vmem:[#allocation2 + $0x8] sm:$0xff]
    %v30 = vld [vmem:[#allocation2 + $0x10] sm:$0xff]
    %v31 = vld [vmem:[#allocation2 + $0x18] sm:$0xff]
    %v32 = vld [vmem:[#allocation2 + $0x20] sm:$0xff]
    %v33 = vld [vmem:[#allocation2 + $0x38] sm:$0x1]
    %vm34 = vcmask 326656
    %v36 = vsel %vm34, %v27, 0
    %38 = vmatpush.msra.mxu0 0.0
    %39 = vmatpush.msra.mxu0 0.0
    %40 = vmatpush.msra.mxu0 0.0
    %41 = vmatpush.msra.mxu0 0.0
    %42 = vmatpush.msra.mxu0 0.0
    %43 = vmatpush.msra.mxu0 0.0
    %44 = vmatpush.msra.mxu0 0.0
    %45 = vmatpush.msra.mxu0 0.0
    %46 = vmatpush.msra.mxu0 0.0
    %47 = vmatpush.msra.mxu0 0.0
    %48 = vmatpush.msra.mxu0 0.0
    %49 = vmatpush.msra.mxu0 %v32
    %50 = vmatpush.msra.mxu0 %v31
    %51 = vmatpush.msra.mxu0 %v30
    %52 = vmatpush.msra.mxu0 %v29
    %53 = vmatpush.msra.mxu0 %v28
    %54 = vmatmul.f32.gmra.mxu0 %v36
    %v55 = vpop.f32.mrf.mxu0
    %v56 = vadd.f32 %v33, %v55
    %57 = vdwg.mxu0
    %58 = vst [vmem:[%s2] sm:$0x1] 0.0
    %v59 = vperm.slane %v27, 0
    %60 = vrot.lane.b32.xlu0 %v59, 104
    %v61 = vpop.permute.xlu0 %60
    %vm63 = vcmask 57344
    %64 = vst.msk [vmem:[%s2] sm:$0x1] %vm63, %v61
    %66 = vrot.lane.b32.xlu0 %v56, 8
    %v67 = vpop.permute.xlu0 %66
    %vm69 = vcmask 122944
    %70 = vst.msk [vmem:[%s2] sm:$0x1] %vm69, %v67
    %v71 = vld [vmem:[%s2] sm:$0x1]
    %v72 = vld [vmem:[#allocation2 + $0x28] sm:$0xff]
    %v73 = vld [vmem:[#allocation2 + $0x30] sm:$0xff]
    %v74 = vld [vmem:[#allocation2 + $0x39] sm:$0x1]
    %vm75 = vcmask 130048
    %v77 = vsel %vm75, %v71, 0
    %79 = vmatpush.msra.mxu0 0.0
    %80 = vmatpush.msra.mxu0 0.0
    %81 = vmatpush.msra.mxu0 0.0
    %82 = vmatpush.msra.mxu0 0.0
    %83 = vmatpush.msra.mxu0 0.0
    %84 = vmatpush.msra.mxu0 0.0
    %85 = vmatpush.msra.mxu0 0.0
    %86 = vmatpush.msra.mxu0 0.0
    %87 = vmatpush.msra.mxu0 0.0
    %88 = vmatpush.msra.mxu0 0.0
    %89 = vmatpush.msra.mxu0 0.0
    %90 = vmatpush.msra.mxu0 0.0
    %91 = vmatpush.msra.mxu0 0.0
    %92 = vmatpush.msra.mxu0 0.0
    %93 = vmatpush.msra.mxu0 %v73
    %94 = vmatpush.msra.mxu0 %v72
    %95 = vmatmul.f32.gmra.mxu0 %v77
    %v96 = vpop.f32.mrf.mxu0
    %v97 = vadd.f32 %v74, %v96
    %98 = vdwg.mxu0
    %v99 = vmax.f32 %v97, 0.0
    %v100 = vld [vmem:[#allocation2 + $0x3a] sm:$0x1]
    %102 = vrot.lane.b32.xlu0 %v100, 32
    %v103 = vpop.permute.xlu0 %102
    %v105 = vmul.f32 %v99, %v103
    %107 = vrot.lane.b32.xlu0 %v105, 96
    %v108 = vpop.permute.xlu0 %107
    %vm110 = vcmask 253952
    %v111 = vsel %vm110, %v108, 0.0
    %112 = vadd.xlane.f32.xlu0 %v111
    %v113 = vpop.xlane.xlu0 %112
    %v114 = vld [vmem:[#allocation2 + $0x3b] sm:$0x1]
    %v115 = vadd.f32 %v113, %v114
    %vm116 = vcmp.gt.f32.partialorder %v114, 20.0
    %v117 = vmin.f32 %v114, 20.0
    %v118 = vmul.f32 %v117, 1.442695
    %v119 = vpow.pop %v118
    %v120 = vadd.f32 %v119, 1.0
    %v121 = vlog2.pop %v120
    %v122 = vmul.f32 %v121, 0.6931472
    %v123 = vmul.f32 -0.5, %v119
    %v124 = vadd.f32 %v123, 1.0
    %v125 = vmul.f32 %v124, %v119
    %v126 = vand.u32 2147483647, %v119
    %vm127 = vcmp.lt.f32.partialorder %v126, 0.0004427343
    %v128 = vsel %vm127, %v125, %v122
    %v129 = vsel %vm116, %v114, %v128
    %v130 = vrsqrt.pop %v129
    %v131 = vmul.f32 %v130, %v129
    %v132 = vmul.f32 %v131, %v130
    %v133 = vmul.f32 0.5, %v132
    %v134 = vsub.f32 1.5, %v133
    %v135 = vmul.f32 %v130, %v134
    %v136 = vmul.f32 %v129, %v135
    %vm137 = vcmp.eq.f32.partialorder %v129, inf
    %v138 = vsel %vm137, %v129, %v136
    %vm139 = vcmp.eq.f32.partialorder %v129, 0.0
    %v140 = vand.u32 %v129, 2147483648
    %v141 = vsel %vm139, %v140, %v138
    %143 = vrot.lane.b32.xlu0 %v97, 16
    %v144 = vpop.permute.xlu0 %143
    %vm146 = vcmask 385152
    %147 = vst.msk [vmem:[%s2] sm:$0x1] %vm146, %v144
    %149 = vrot.lane.b32.xlu0 %v114, 48
    %v150 = vpop.permute.xlu0 %149
    %vm152 = vcmask 401792
    %153 = vst.msk [vmem:[%s2] sm:$0x1] %vm152, %v150
    %155 = vrot.lane.b32.xlu0 %v141, 48
    %v156 = vpop.permute.xlu0 %155
    %vm158 = vcmask 418192
    %159 = vst.msk [vmem:[%s2] sm:$0x1] %vm158, %v156
    %161 = vrot.lane.b32.xlu0 %v115, 48
    %v162 = vpop.permute.xlu0 %161
    %vm164 = vcmask 426400
    %165 = vst.msk [vmem:[%s2] sm:$0x1] %vm164, %v162
    // Predicated region
    $region14: #{actor_critic_planner_forward.1} parent=1 // pred_check
      _
    $region15: #{actor_critic_planner_forward.1} parent=1 // pred_check_branch
      %167 = sbr.rel (0) target = $region17
    $region16: #{actor_critic_planner_forward.1} parent=1 // pred_region
      _
    $region17: #{actor_critic_planner_forward.1} parent=1 // pred_fallthru
      _
    // Predicated region
    $region18: #{actor_critic_planner_forward.1} parent=1 // pred_check
      _
    $region19: #{actor_critic_planner_forward.1} parent=1 // pred_check_branch
      %169 = sbr.rel (0) target = $region21
    $region20: #{actor_critic_planner_forward.1} parent=1 // pred_region
      _
    $region21: #{actor_critic_planner_forward.1} parent=1 // pred_fallthru
      _
    %170 = vsyncpa [#allocation3], 1

</llo_original>
